<compile_context>
chip_gen: v7x
topology: tpu7x:2x2x1
jax: 0.10.0
libtpu: 0.0.40
codegen_flags: <defaults>
</compile_context>

<pallas_src>
import math

import jax
import jax.numpy as jnp
from jax.experimental import pallas as pl
from jax.experimental.pallas import tpu as pltpu


_LANE = 128     # last-dim grain (vreg lanes / MXU tile)
_SUBLANE = 8    # second-to-last-dim grain (f32 sublanes)
_MAX_TB = 256   # batch-tile cap (fits v5e 16 MiB scoped VMEM with margin)


def _round_up(n, m):
    return ((n + m - 1) // m) * m


def _pad2d(a, rows, cols):
    """Zero-pad a 2-D array up to (rows, cols)."""
    return jnp.pad(a, ((0, rows - a.shape[0]), (0, cols - a.shape[1])))


# ----------------------------- Pallas kernels ------------------------------

def _fc_head_prev_kernel(x_ref, prev_ref, w1_ref, b1_ref, w2_ref, b2_ref,
                         fwd_ref, out_ref):
    """fwd = relu(x @ W1 + b1);  out = (fwd (+) prev) @ W2 + b2.

    `(+)` is the concat realized as a VPU add: h's padded lanes are exactly
    zero (zero-padded W1/b1 columns, ReLU(0)=0) and prev has been shifted into
    lanes [output_size, output_size+prev_dim) wrapper-side, so `h + prev`
    equals concat([fwd, prev], -1) laid out in one 128-lane tile.  W2 is the
    combined (hp, cp) matrix, so a single MXU dot replaces the two dots + add.
    """
    h = jnp.dot(x_ref[...], w1_ref[...], preferred_element_type=jnp.float32)
    h = jnp.maximum(h + b1_ref[...], 0.0)            # f32 epilogue on the VPU
    fwd_ref[...] = h.astype(fwd_ref.dtype)

    hc = h + prev_ref[...].astype(jnp.float32)       # "concat" via one vadd
    y = jnp.dot(hc.astype(w2_ref.dtype), w2_ref[...],
                preferred_element_type=jnp.float32)
    out_ref[...] = (y + b2_ref[...]).astype(out_ref.dtype)


def _fc_head_kernel(x_ref, w1_ref, b1_ref, w2_ref, b2_ref, fwd_ref, out_ref):
    """Same as above with no prev operand (prev_output is None / prev_dim=0)."""
    h = jnp.dot(x_ref[...], w1_ref[...], preferred_element_type=jnp.float32)
    h = jnp.maximum(h + b1_ref[...], 0.0)
    fwd_ref[...] = h.astype(fwd_ref.dtype)

    y = jnp.dot(h.astype(w2_ref.dtype), w2_ref[...],
                preferred_element_type=jnp.float32)
    out_ref[...] = (y + b2_ref[...]).astype(out_ref.dtype)


def _linear_relu_kernel(x_ref, w_ref, b_ref, o_ref):
    """o = relu(x @ W + b)   (only_forward / no_output path)."""
    y = jnp.dot(x_ref[...], w_ref[...], preferred_element_type=jnp.float32)
    o_ref[...] = jnp.maximum(y + b_ref[...], 0.0).astype(o_ref.dtype)


# --------------------------- pallas_call wrappers ---------------------------

def _specs(act_arrays, res_arrays, out_dims, tb):
    """Batch-tiled specs: activations/outputs tile over the batch grid axis,
    weights/biases stay resident (same block every step -> no re-DMA)."""
    in_specs = ([pl.BlockSpec((tb, a.shape[1]), lambda i: (i, 0))
                 for a in act_arrays]
                + [pl.BlockSpec(w.shape, lambda i: (0, 0))
                   for w in res_arrays])
    out_specs = [pl.BlockSpec((tb, d), lambda i: (i, 0)) for d in out_dims]
    return in_specs, out_specs


def _cost(flops, arrays, out_elems_bytes):
    in_bytes = sum(int(a.size) * a.dtype.itemsize for a in arrays)
    return pl.CostEstimate(flops=flops, transcendentals=0,
                           bytes_accessed=in_bytes + out_elems_bytes)


def fc_head_prev(xp, prevp, w1p, b1p, w2p, b2p, *, tb, fwd_dtype, out_dtype):
    bpad, k = xp.shape
    hp, cp = w1p.shape[1], w2p.shape[1]
    nb = bpad // tb
    in_specs, out_specs = _specs((xp, prevp), (w1p, b1p, w2p, b2p),
                                 (hp, cp), tb)
    out_bytes = (bpad * hp * jnp.dtype(fwd_dtype).itemsize
                 + bpad * cp * jnp.dtype(out_dtype).itemsize)
    return pl.pallas_call(
        _fc_head_prev_kernel,
        out_shape=(jax.ShapeDtypeStruct((bpad, hp), fwd_dtype),
                   jax.ShapeDtypeStruct((bpad, cp), out_dtype)),
        grid_spec=pltpu.PrefetchScalarGridSpec(
            num_scalar_prefetch=0, grid=(nb,),
            in_specs=in_specs, out_specs=out_specs),
        compiler_params=pltpu.CompilerParams(
            dimension_semantics=("parallel",)),
        cost_estimate=_cost(2 * bpad * (k * hp + hp * cp),
                            (xp, prevp, w1p, b1p, w2p, b2p), out_bytes),
    )(xp, prevp, w1p, b1p, w2p, b2p)


def fc_head(xp, w1p, b1p, w2p, b2p, *, tb, fwd_dtype, out_dtype):
    bpad, k = xp.shape
    hp, cp = w1p.shape[1], w2p.shape[1]
    nb = bpad // tb
    in_specs, out_specs = _specs((xp,), (w1p, b1p, w2p, b2p), (hp, cp), tb)
    out_bytes = (bpad * hp * jnp.dtype(fwd_dtype).itemsize
                 + bpad * cp * jnp.dtype(out_dtype).itemsize)
    return pl.pallas_call(
        _fc_head_kernel,
        out_shape=(jax.ShapeDtypeStruct((bpad, hp), fwd_dtype),
                   jax.ShapeDtypeStruct((bpad, cp), out_dtype)),
        grid_spec=pltpu.PrefetchScalarGridSpec(
            num_scalar_prefetch=0, grid=(nb,),
            in_specs=in_specs, out_specs=out_specs),
        compiler_params=pltpu.CompilerParams(
            dimension_semantics=("parallel",)),
        cost_estimate=_cost(2 * bpad * (k * hp + hp * cp),
                            (xp, w1p, b1p, w2p, b2p), out_bytes),
    )(xp, w1p, b1p, w2p, b2p)


def linear_relu(xp, wp, bp_bias, *, tb, fwd_dtype):
    bpad, k = xp.shape
    hp = wp.shape[1]
    nb = bpad // tb
    in_specs, out_specs = _specs((xp,), (wp, bp_bias), (hp,), tb)
    out_bytes = bpad * hp * jnp.dtype(fwd_dtype).itemsize
    return pl.pallas_call(
        _linear_relu_kernel,
        out_shape=jax.ShapeDtypeStruct((bpad, hp), fwd_dtype),
        grid_spec=pltpu.PrefetchScalarGridSpec(
            num_scalar_prefetch=0, grid=(nb,),
            in_specs=in_specs, out_specs=out_specs[0]),
        compiler_params=pltpu.CompilerParams(
            dimension_semantics=("parallel",)),
        cost_estimate=_cost(2 * bpad * k * hp, (xp, wp, bp_bias), out_bytes),
    )(xp, wp, bp_bias)


# ----------------------------- Module wrapper -------------------------------

class FcBlockWOutputPallas:
    """JAX/Pallas re-implementation of ztw VGG_SDN.FcBlockWOutput."""

    def __init__(self, key, input_size, output_size, num_classes,
                 add_output=True, output_id=0, prev_dim=0,
                 compute_dtype=jnp.float32):
        self.no_output = not add_output
        self.output_id = output_id
        self.depth = 1
        self.input_size = input_size
        self.output_size = output_size
        self.num_classes = num_classes
        self.prev_dim = prev_dim if add_output else 0
        self.compute_dtype = compute_dtype

        # Hidden dim padded so the [fwd | prev] concat fits in one lane tile.
        # K dim (input_size) is left unpadded: block == full array dim is legal
        # and halves x/W1 DMA bytes.
        self.hp = _round_up(output_size + self.prev_dim, _LANE)
        self.cp = _round_up(num_classes, _LANE)

        k1, k2, k3, k4 = jax.random.split(key, 4)

        # nn.Linear(input_size, output_size): U(-1/sqrt(fan_in), +1/sqrt(fan_in)),
        # stored transposed as (in, out).
        bound1 = 1.0 / math.sqrt(input_size)
        self.w1 = jax.random.uniform(k1, (input_size, output_size), jnp.float32,
                                     minval=-bound1, maxval=bound1)
        self.b1 = jax.random.uniform(k2, (1, output_size), jnp.float32,
                                     minval=-bound1, maxval=bound1)

        # Zero-padded kernel copies (padded once, at init).  Padded columns of
        # W1/b1 MUST stay exactly zero -- the lane-fold concat relies on it.
        self.w1p = _pad2d(self.w1, input_size, self.hp).astype(compute_dtype)
        self.b1p = _pad2d(self.b1, 1, self.hp).astype(jnp.float32)

        if add_output:
            in2 = output_size + prev_dim
            bound2 = 1.0 / math.sqrt(in2)
            self.w2 = jax.random.uniform(k3, (in2, num_classes), jnp.float32,
                                         minval=-bound2, maxval=bound2)
            self.b2 = jax.random.uniform(k4, (1, num_classes), jnp.float32,
                                         minval=-bound2, maxval=bound2)
            # Combined W2: rows [0:output_size) act on fwd lanes, rows
            # [output_size:in2) act on the prev lanes -> the concat vanishes.
            self.w2p = _pad2d(self.w2, self.hp, self.cp).astype(compute_dtype)
            self.b2p = _pad2d(self.b2, 1, self.cp).astype(jnp.float32)
        else:
            self.w2 = self.b2 = None
            self.w2p = self.b2p = None

    def _batch_tile(self, b):
        tb = min(_MAX_TB, _round_up(b, _SUBLANE))
        bpad = _round_up(b, tb)
        return tb, bpad

    def __call__(self, x, prev_output=None):
        b = x.shape[0]
        tb, bpad = self._batch_tile(b)
        cd = self.compute_dtype
        xp = jnp.pad(x.astype(cd), ((0, bpad - b), (0, 0)))   # batch pad only

        if self.no_output:
            # only_forward path
            fwd_p = linear_relu(xp, self.w1p, self.b1p, tb=tb, fwd_dtype=cd)
            return fwd_p[:b, :self.output_size], 0, None

        if self.prev_dim > 0:
            if prev_output is None:
                raise ValueError(
                    "prev_dim > 0 requires prev_output (the PyTorch module "
                    "would reject this combination).")
            # Shift prev into lanes [output_size, output_size+prev_dim) so the
            # in-kernel add implements the concat.
            prevp = jnp.pad(
                prev_output[0].astype(cd),
                ((0, bpad - b),
                 (self.output_size, self.hp - self.output_size - self.prev_dim)))
            fwd_p, out_p = fc_head_prev(xp, prevp, self.w1p, self.b1p,
                                        self.w2p, self.b2p, tb=tb,
                                        fwd_dtype=cd, out_dtype=jnp.float32)
        else:
            fwd_p, out_p = fc_head(xp, self.w1p, self.b1p, self.w2p, self.b2p,
                                   tb=tb, fwd_dtype=cd, out_dtype=jnp.float32)

        fwd = fwd_p[:b, :self.output_size]
        output = out_p[:b, :self.num_classes]
        return fwd, 1, [output]


# --------------------------------- main -------------------------------------

if __name__ == "__main__":
    key = jax.random.PRNGKey(0)
    k_params, k_params2, k_params3, k_x, k_prev = jax.random.split(key, 5)

    batch = 8
    input_size = 64
    output_size = 32
    num_classes = 10
    prev_dim = 16

    x = jax.random.normal(k_x, (batch, input_size), jnp.float32)
    prev = jax.random.normal(k_prev, (batch, prev_dim), jnp.float32)

    # ---- add_output=True with prev (lane-folded concat, single W2 dot) ----
    block = FcBlockWOutputPallas(k_params, input_size, output_size,
                                 num_classes, add_output=True,
                                 prev_dim=prev_dim)
    fwd, flag, outputs = block(x, prev_output=[prev])
    fwd = jax.block_until_ready(fwd)
    output = jax.block_until_ready(outputs[0])

    ref_fwd = jnp.maximum(x @ block.w1 + block.b1, 0.0)
    ref_out = jnp.concatenate([ref_fwd, prev], -1) @ block.w2 + block.b2

    assert flag == 1
    assert fwd.shape == (batch, output_size)
    assert output.shape == (batch, num_classes)
    assert jnp.allclose(fwd, ref_fwd, rtol=1e-5, atol=1e-5)
    assert jnp.allclose(output, ref_out, rtol=1e-5, atol=1e-5)

    # ---- add_output=True, prev_dim=0, prev_output=None (specialized) ------
    block0 = FcBlockWOutputPallas(k_params2, input_size, output_size,
                                  num_classes, add_output=True, prev_dim=0)
    fwd0, flag0, out0 = block0(x)
    fwd0 = jax.block_until_ready(fwd0)
    output0 = jax.block_until_ready(out0[0])
    ref_fwd0 = jnp.maximum(x @ block0.w1 + block0.b1, 0.0)
    ref_out0 = ref_fwd0 @ block0.w2 + block0.b2
    assert flag0 == 1
    assert jnp.allclose(fwd0, ref_fwd0, rtol=1e-5, atol=1e-5)
    assert jnp.allclose(output0, ref_out0, rtol=1e-5, atol=1e-5)

    # ---- only_forward / no_output path -------------------------------------
    block_nf = FcBlockWOutputPallas(k_params3, input_size, output_size,
                                    num_classes, add_output=False)
    fwd2, flag2, out2 = block_nf(x)
    fwd2 = jax.block_until_ready(fwd2)
    ref_fwd2 = jnp.maximum(x @ block_nf.w1 + block_nf.b1, 0.0)
    assert flag2 == 0 and out2 is None
    assert jnp.allclose(fwd2, ref_fwd2, rtol=1e-5, atol=1e-5)

    # ---- bf16 fast path (v6e/v7x MXU): loose tolerance, same semantics -----
    block_bf = FcBlockWOutputPallas(k_params, input_size, output_size,
                                    num_classes, add_output=True,
                                    prev_dim=prev_dim,
                                    compute_dtype=jnp.bfloat16)
    fwd_bf, flag_bf, out_bf = block_bf(x, prev_output=[prev])
    fwd_bf = jax.block_until_ready(fwd_bf)
    out_bf0 = jax.block_until_ready(out_bf[0])
    assert flag_bf == 1
    assert jnp.allclose(fwd_bf.astype(jnp.float32), ref_fwd,
                        rtol=5e-2, atol=5e-2)
    assert jnp.allclose(out_bf0.astype(jnp.float32), ref_out,
                        rtol=5e-2, atol=5e-2)

    print("KERNEL_OK")
</pallas_src>

<mosaic_0001>
module attributes {stable_mosaic.version = 11 : i64} {
  func.func @_fc_head_prev_kernel(%arg0: i32, %arg1: memref<8x64xf32, #tpu.memory_space<vmem>>, %arg2: memref<8x128xf32, #tpu.memory_space<vmem>>, %arg3: memref<64x128xf32, #tpu.memory_space<vmem>>, %arg4: memref<1x128xf32, #tpu.memory_space<vmem>>, %arg5: memref<128x128xf32, #tpu.memory_space<vmem>>, %arg6: memref<1x128xf32, #tpu.memory_space<vmem>>, %arg7: memref<8x128xf32, #tpu.memory_space<vmem>>, %arg8: memref<8x128xf32, #tpu.memory_space<vmem>>) attributes {dimension_semantics = [#tpu.dimension_semantics<parallel>], iteration_bounds = array<i64: 1>, scalar_prefetch = 0 : i64, scratch_operands = 0 : i64, tpu.core_type = #tpu.core_type<tc>, window_params = [{transform_indices = @transform_0, window_bounds = array<i64: 8, 64>}, {transform_indices = @transform_1, window_bounds = array<i64: 8, 128>}, {pipeline_mode = #tpu.pipeline_mode<synchronous>, transform_indices = @transform_2, window_bounds = array<i64: 64, 128>}, {pipeline_mode = #tpu.pipeline_mode<synchronous>, transform_indices = @transform_3, window_bounds = array<i64: 1, 128>}, {pipeline_mode = #tpu.pipeline_mode<synchronous>, transform_indices = @transform_4, window_bounds = array<i64: 128, 128>}, {pipeline_mode = #tpu.pipeline_mode<synchronous>, transform_indices = @transform_5, window_bounds = array<i64: 1, 128>}, {transform_indices = @transform_6, window_bounds = array<i64: 8, 128>}, {transform_indices = @transform_7, window_bounds = array<i64: 8, 128>}]} {
    %c0 = arith.constant 0 : index
    %c0_0 = arith.constant 0 : index
    %0 = vector.load %arg1[%c0, %c0_0] : memref<8x64xf32, #tpu.memory_space<vmem>>, vector<8x64xf32>
    %c0_1 = arith.constant 0 : index
    %c0_2 = arith.constant 0 : index
    %1 = vector.load %arg3[%c0_1, %c0_2] : memref<64x128xf32, #tpu.memory_space<vmem>>, vector<64x128xf32>
    %cst = arith.constant dense<0.000000e+00> : vector<8x128xf32>
    %2 = tpu.matmul %0, %1, %cst {dimension_numbers = #tpu.dot_dimension_numbers<[1], [0], [0], [1], [0, 0, 1, 1], [], []>} : vector<8x64xf32>, vector<64x128xf32>, vector<8x128xf32> -> vector<8x128xf32>
    %c0_3 = arith.constant 0 : index
    %c0_4 = arith.constant 0 : index
    %3 = vector.load %arg4[%c0_3, %c0_4] : memref<1x128xf32, #tpu.memory_space<vmem>>, vector<1x128xf32>
    %4 = vector.broadcast %3 : vector<1x128xf32> to vector<8x128xf32>
    %5 = arith.addf %2, %4 : vector<8x128xf32>
    %cst_5 = arith.constant 0.000000e+00 : f32
    %6 = vector.broadcast %cst_5 : f32 to vector<8x128xf32>
    %7 = arith.maximumf %5, %6 : vector<8x128xf32>
    %c0_6 = arith.constant 0 : index
    %c0_7 = arith.constant 0 : index
    %8 = vector.load %arg7[%c0_6, %c0_7] : memref<8x128xf32, #tpu.memory_space<vmem>>, vector<8x128xf32>
    tpu.vector_store %arg7[%c0_6, %c0_7], %7 {strides = array<i32>} : memref<8x128xf32, #tpu.memory_space<vmem>>, vector<8x128xf32>,
    %c0_8 = arith.constant 0 : index
    %c0_9 = arith.constant 0 : index
    %9 = vector.load %arg2[%c0_8, %c0_9] : memref<8x128xf32, #tpu.memory_space<vmem>>, vector<8x128xf32>
    %10 = arith.addf %7, %9 : vector<8x128xf32>
    %c0_10 = arith.constant 0 : index
    %c0_11 = arith.constant 0 : index
    %11 = vector.load %arg5[%c0_10, %c0_11] : memref<128x128xf32, #tpu.memory_space<vmem>>, vector<128x128xf32>
    %cst_12 = arith.constant dense<0.000000e+00> : vector<8x128xf32>
    %12 = tpu.matmul %10, %11, %cst_12 {dimension_numbers = #tpu.dot_dimension_numbers<[1], [0], [0], [1], [0, 0, 1, 1], [], []>} : vector<8x128xf32>, vector<128x128xf32>, vector<8x128xf32> -> vector<8x128xf32>
    %c0_13 = arith.constant 0 : index
    %c0_14 = arith.constant 0 : index
    %13 = vector.load %arg6[%c0_13, %c0_14] : memref<1x128xf32, #tpu.memory_space<vmem>>, vector<1x128xf32>
    %14 = vector.broadcast %13 : vector<1x128xf32> to vector<8x128xf32>
    %15 = arith.addf %12, %14 : vector<8x128xf32>
    %c0_15 = arith.constant 0 : index
    %c0_16 = arith.constant 0 : index
    %16 = vector.load %arg8[%c0_15, %c0_16] : memref<8x128xf32, #tpu.memory_space<vmem>>, vector<8x128xf32>
    tpu.vector_store %arg8[%c0_15, %c0_16], %15 {strides = array<i32>} : memref<8x128xf32, #tpu.memory_space<vmem>>, vector<8x128xf32>,
    return
  }
  func.func @transform_0(%arg0: i32) -> (i32, i32) {
    %c0_i32 = arith.constant 0 : i32
    %c0_i32_0 = arith.constant 0 : i32
    return %arg0, %c0_i32 : i32, i32
  }
  func.func @transform_1(%arg0: i32) -> (i32, i32) {
    %c0_i32 = arith.constant 0 : i32
    %c0_i32_0 = arith.constant 0 : i32
    return %arg0, %c0_i32 : i32, i32
  }
  func.func @transform_2(%arg0: i32) -> (i32, i32) {
    %c0_i32 = arith.constant 0 : i32
    %c0_i32_0 = arith.constant 0 : i32
    %c0_i32_1 = arith.constant 0 : i32
    return %c0_i32, %c0_i32_0 : i32, i32
  }
  func.func @transform_3(%arg0: i32) -> (i32, i32) {
    %c0_i32 = arith.constant 0 : i32
    %c0_i32_0 = arith.constant 0 : i32
    %c0_i32_1 = arith.constant 0 : i32
    return %c0_i32, %c0_i32_0 : i32, i32
  }
  func.func @transform_4(%arg0: i32) -> (i32, i32) {
    %c0_i32 = arith.constant 0 : i32
    %c0_i32_0 = arith.constant 0 : i32
    %c0_i32_1 = arith.constant 0 : i32
    return %c0_i32, %c0_i32_0 : i32, i32
  }
  func.func @transform_5(%arg0: i32) -> (i32, i32) {
    %c0_i32 = arith.constant 0 : i32
    %c0_i32_0 = arith.constant 0 : i32
    %c0_i32_1 = arith.constant 0 : i32
    return %c0_i32, %c0_i32_0 : i32, i32
  }
  func.func @transform_6(%arg0: i32) -> (i32, i32) {
    %c0_i32 = arith.constant 0 : i32
    %c0_i32_0 = arith.constant 0 : i32
    return %arg0, %c0_i32 : i32, i32
  }
  func.func @transform_7(%arg0: i32) -> (i32, i32) {
    %c0_i32 = arith.constant 0 : i32
    %c0_i32_0 = arith.constant 0 : i32
    return %arg0, %c0_i32 : i32, i32
  }
}

</mosaic_0001>

<llo_original>
// kernel: tpu_custom_call.1
$region0: #{tpu_custom_call.1}
  #allocation0 [shape = 'u32[]', space=smem, size = 0x4, offset = 0x4, fixed_abs, tag = 'smem constant byte address 0x4 - core index']
  #allocation1 [shape = 'u32[144,128]{1,0:T(1,128)}', space=vmem, size = 0x12000, scoped, tag = 'internal scratch']
  %s0 = inlined_call_operand.hbm [shape: f32[8,64], index: 0, kind: input, shape index: {}]
  %s1 = inlined_call_operand.hbm [shape: f32[8,128], index: 1, kind: input, shape index: {}]
  %s2 = inlined_call_operand.hbm [shape: f32[64,128], index: 2, kind: input, shape index: {}]
  %s3 = inlined_call_operand.vmem [shape: f32[1,128], index: 3, kind: input, shape index: {}]
  %s4 = inlined_call_operand.hbm [shape: f32[128,128], index: 4, kind: input, shape index: {}]
  %s5 = inlined_call_operand.vmem [shape: f32[1,128], index: 5, kind: input, shape index: {}]
  %s6 = inlined_call_operand.hbm [shape: f32[8,128], index: 6, kind: output, shape index: {0}]
  %s7 = inlined_call_operand.hbm [shape: f32[8,128], index: 7, kind: output, shape index: {1}]
  %8 = xla_tuple %s6, %s7
  %s9 = sld [smem:[#allocation0]]
  $region58: #{tpu_custom_call.1} parent=0
    _
  %s11 = ssub.s32 1, %s9
  %s12 = scalar_select 0, %s11, %s9
  $region1: #{tpu_custom_call.1} parent=0
    #allocation2 [shape = 'u8[4096]{0}', space=vmem, size = 0x1000, scoped, tag = 'input window, operand 0, single buffered']
    #allocation3 [shape = 's32[1]{0}', space=sflag, size = 0x4, scoped, tag = 'scoped memory for tpu_custom_call.1']
    #allocation4 [shape = 's32[1]{0}', space=sflag, size = 0x4, scoped, tag = 'scoped memory for tpu_custom_call.1']
    #allocation5 [shape = 'u8[4096]{0}', space=vmem, size = 0x1000, scoped, tag = 'input window, operand 1, single buffered']
    #allocation6 [shape = 's32[1]{0}', space=sflag, size = 0x4, scoped, tag = 'scoped memory for tpu_custom_call.1']
    #allocation7 [shape = 'u8[32768]{0}', space=vmem, size = 0x8000, scoped, tag = 'input window, operand 2, single buffered']
    #allocation8 [shape = 'u8[65536]{0}', space=vmem, size = 0x10000, scoped, tag = 'input window, operand 4, single buffered']
    #allocation9 [shape = 's32[1]{0}', space=sflag, size = 0x4, scoped, tag = 'scoped memory for tpu_custom_call.1']
    #allocation10 [shape = 'u8[4096]{0}', space=vmem, size = 0x1000, scoped, tag = 'output window, operand 0, single buffered']
    #allocation11 [shape = 'u8[4096]{0}', space=vmem, size = 0x1000, scoped, tag = 'output window, operand 1, single buffered']
    #allocation12 [shape = 's32[1]{0}', space=sflag, size = 0x4, scoped, tag = 'scoped memory for tpu_custom_call.1']
    %13 = vsyncpa [#allocation3], 0
    %14 = vsyncpa [#allocation6], 0
    %15 = vsyncpa [#allocation9], 0
    %16 = vsyncpa [#allocation4], 0
    %17 = vsyncpa [#allocation12], 0
    // Predicated region
    $region2: #{tpu_custom_call.1} parent=1 // pred_check
      _
    $region3: #{tpu_custom_call.1} parent=1 // pred_check_branch
      %19 = sbr.rel (0) target = $region5
    $region4: #{tpu_custom_call.1} parent=1 // pred_region
      %s21 = ssub.s32 128, 128
      %22 = vsyncadd [#allocation3], %s21
      %s24 = sshll.u32 [#allocation2], 4
      %s25 = int_to_ptr.vmem [resolvable:$true] %s24
      %27 = dma.hbm_to_vmem [thread:$0]  %s0, 128, %s25, [#allocation3]
    $region5: #{tpu_custom_call.1} parent=1 // pred_fallthru
      _
    // Predicated region
    $region6: #{tpu_custom_call.1} parent=1 // pred_check
      _
    $region7: #{tpu_custom_call.1} parent=1 // pred_check_branch
      %29 = sbr.rel (0) target = $region9
    $region8: #{tpu_custom_call.1} parent=1 // pred_region
      %s31 = ssub.s32 128, 128
      %32 = vsyncadd [#allocation6], %s31
      %s34 = sshll.u32 [#allocation5], 4
      %s35 = int_to_ptr.vmem [resolvable:$true] %s34
      %37 = dma.hbm_to_vmem [thread:$0]  %s1, 128, %s35, [#allocation6]
    $region9: #{tpu_custom_call.1} parent=1 // pred_fallthru
      _
    // Predicated region
    $region10: #{tpu_custom_call.1} parent=1 // pred_check
      _
    $region11: #{tpu_custom_call.1} parent=1 // pred_check_branch
      %39 = sbr.rel (0) target = $region13
    $region12: #{tpu_custom_call.1} parent=1 // pred_region
      %s41 = ssub.s32 1024, 1024
      %42 = vsyncadd [#allocation6], %s41
      %s43 = sshll.u32 [#allocation7], 4
      %s44 = int_to_ptr.vmem [resolvable:$true] %s43
      %49 = dma.hbm_to_vmem [thread:$0]  %s2, 1024, %s44, [#allocation6], 128, 128, 8
    $region13: #{tpu_custom_call.1} parent=1 // pred_fallthru
      _
    // Predicated region
    $region14: #{tpu_custom_call.1} parent=1 // pred_check
      _
    $region15: #{tpu_custom_call.1} parent=1 // pred_check_branch
      %51 = sbr.rel (0) target = $region17
    $region16: #{tpu_custom_call.1} parent=1 // pred_region
      _
    $region17: #{tpu_custom_call.1} parent=1 // pred_fallthru
      _
    // Predicated region
    $region18: #{tpu_custom_call.1} parent=1 // pred_check
      _
    $region19: #{tpu_custom_call.1} parent=1 // pred_check_branch
      %53 = sbr.rel (0) target = $region21
    $region20: #{tpu_custom_call.1} parent=1 // pred_region
      %s55 = ssub.s32 2048, 2048
      %56 = vsyncadd [#allocation9], %s55
      %s57 = sshll.u32 [#allocation8], 4
      %s58 = int_to_ptr.vmem [resolvable:$true] %s57
      %63 = dma.hbm_to_vmem [thread:$0]  %s4, 2048, %s58, [#allocation9], 128, 128, 8
    $region21: #{tpu_custom_call.1} parent=1 // pred_fallthru
      _
    // Predicated region
    $region22: #{tpu_custom_call.1} parent=1 // pred_check
      _
    $region23: #{tpu_custom_call.1} parent=1 // pred_check_branch
      %65 = sbr.rel (0) target = $region25
    $region24: #{tpu_custom_call.1} parent=1 // pred_region
      _
    $region25: #{tpu_custom_call.1} parent=1 // pred_fallthru
      _
    // Predicated region
    $region26: #{tpu_custom_call.1} parent=1 // pred_check
      _
    $region27: #{tpu_custom_call.1} parent=1 // pred_check_branch
      %67 = sbr.rel (0) target = $region29
    $region28: #{tpu_custom_call.1} parent=1 // pred_region
      %68 = dma.done [#allocation3], 128
    $region29: #{tpu_custom_call.1} parent=1 // pred_fallthru
      _
    // Predicated region
    $region30: #{tpu_custom_call.1} parent=1 // pred_check
      _
    $region31: #{tpu_custom_call.1} parent=1 // pred_check_branch
      %70 = sbr.rel (0) target = $region33
    $region32: #{tpu_custom_call.1} parent=1 // pred_region
      %71 = dma.done [#allocation6], 128
    $region33: #{tpu_custom_call.1} parent=1 // pred_fallthru
      _
    // Predicated region
    $region34: #{tpu_custom_call.1} parent=1 // pred_check
      _
    $region35: #{tpu_custom_call.1} parent=1 // pred_check_branch
      %73 = sbr.rel (0) target = $region37
    $region36: #{tpu_custom_call.1} parent=1 // pred_region
      %74 = dma.done [#allocation6], 1024
    $region37: #{tpu_custom_call.1} parent=1 // pred_fallthru
      _
    // Predicated region
    $region38: #{tpu_custom_call.1} parent=1 // pred_check
      _
    $region39: #{tpu_custom_call.1} parent=1 // pred_check_branch
      %76 = sbr.rel (0) target = $region41
    $region40: #{tpu_custom_call.1} parent=1 // pred_region
      %77 = dma.done [#allocation9], 2048
    $region41: #{tpu_custom_call.1} parent=1 // pred_fallthru
      _
    %v78 = vld [vmem:[#allocation2] sm:$0xff]
    %v79 = vld [vmem:[#allocation7] sm:$0xff]
    %v80 = vld [vmem:[#allocation7 + $0x8] sm:$0xff]
    %v81 = vld [vmem:[#allocation7 + $0x10] sm:$0xff]
    %v82 = vld [vmem:[#allocation7 + $0x18] sm:$0xff]
    %v83 = vld [vmem:[#allocation7 + $0x20] sm:$0xff]
    %v84 = vld [vmem:[#allocation7 + $0x28] sm:$0xff]
    %v85 = vld [vmem:[#allocation7 + $0x30] sm:$0xff]
    %v86 = vld [vmem:[#allocation7 + $0x38] sm:$0xff]
    %v87 = vld [vmem:[%s3] sm:$0x1]
    %v89 = vlaneseq
    %v90 = vshrl.u32 %v89, 7
    %v91 = vsub.s32 0, %v90
    %v92 = vrot.slane %v87, %v91
    %vm94 = vcmask 523264
    %v96 = vsel %vm94, %v78, 0
    %98 = vmatprep.subr.mxu0 0.0
    %99 = vmatpush1.msra.mxu0 %v79
    %100 = vmatprep.subr.mxu0 0.0
    %101 = vmatpush1.msra.mxu0 %v80
    %102 = vmatprep.subr.mxu0 0.0
    %103 = vmatpush1.msra.mxu0 %v81
    %104 = vmatprep.subr.mxu0 0.0
    %105 = vmatpush1.msra.mxu0 %v82
    %106 = vmatprep.subr.mxu0 0.0
    %107 = vmatpush1.msra.mxu0 %v83
    %108 = vmatprep.subr.mxu0 0.0
    %109 = vmatpush1.msra.mxu0 %v84
    %110 = vmatprep.subr.mxu0 0.0
    %111 = vmatpush1.msra.mxu0 %v85
    %112 = vmatprep.subr.mxu0 0.0
    %113 = vmatpush1.msra.mxu0 %v86
    %114 = vmatprep.subr.mxu0 0.0
    %115 = vmatpush1.msra.mxu0 0.0
    %116 = vmatprep.subr.mxu0 0.0
    %117 = vmatpush1.msra.mxu0 0.0
    %118 = vmatprep.subr.mxu0 0.0
    %119 = vmatpush1.msra.mxu0 0.0
    %120 = vmatprep.subr.mxu0 0.0
    %121 = vmatpush1.msra.mxu0 0.0
    %122 = vmatprep.subr.mxu0 0.0
    %123 = vmatpush1.msra.mxu0 0.0
    %124 = vmatprep.subr.mxu0 0.0
    %125 = vmatpush1.msra.mxu0 0.0
    %126 = vmatprep.subr.mxu0 0.0
    %127 = vmatpush1.msra.mxu0 0.0
    %128 = vmatprep.subr.mxu0 0.0
    %129 = vmatpush1.msra.mxu0 0.0
    %130 = vmatprep.subr.mxu0 0.0
    %131 = vmatpush1.msra.mxu0 0.0
    %132 = vmatprep.subr.mxu0 0.0
    %133 = vmatpush1.msra.mxu0 0.0
    %134 = vmatprep.subr.mxu0 0.0
    %135 = vmatpush1.msra.mxu0 0.0
    %136 = vmatprep.subr.mxu0 0.0
    %137 = vmatpush1.msra.mxu0 0.0
    %138 = vmatprep.subr.mxu0 0.0
    %139 = vmatpush1.msra.mxu0 0.0
    %140 = vmatprep.subr.mxu0 0.0
    %141 = vmatpush1.msra.mxu0 0.0
    %142 = vmatprep.subr.mxu0 0.0
    %143 = vmatpush1.msra.mxu0 0.0
    %144 = vmatprep.subr.mxu0 0.0
    %145 = vmatpush1.msra.mxu0 0.0
    %146 = vmatprep.subr.mxu0 0.0
    %147 = vmatpush1.msra.mxu0 0.0
    %148 = vmatprep.subr.mxu0 0.0
    %149 = vmatpush1.msra.mxu0 0.0
    %150 = vmatprep.subr.mxu0 0.0
    %151 = vmatpush1.msra.mxu0 0.0
    %152 = vmatprep.subr.mxu0 0.0
    %153 = vmatpush1.msra.mxu0 0.0
    %154 = vmatprep.subr.mxu0 0.0
    %155 = vmatpush1.msra.mxu0 0.0
    %156 = vmatprep.subr.mxu0 0.0
    %157 = vmatpush1.msra.mxu0 0.0
    %158 = vmatprep.subr.mxu0 0.0
    %159 = vmatpush1.msra.mxu0 0.0
    %160 = vmatprep.subr.mxu0 0.0
    %161 = vmatpush1.msra.mxu0 0.0
    %162 = vmatprep.mubr.f32.mxu0 0.0
    %163 = vmatmul.mubr.f32.gmra.mrb[0].mxu0 %v96
    %v164 = vpop.f32.mrb[0].mxu0
    %v165 = vadd.f32 %v92, %v164
    %v166 = vpop.f32.mrb[0].mxu0
    %167 = vdwg.mxu0
    %v168 = vmax.f32 %v165, 0.0
    %169 = vst [vmem:[#allocation10] sm:$0xff] %v168
    %v170 = vld [vmem:[#allocation5] sm:$0xff]
    %v171 = vadd.f32 %v168, %v170
    %v172 = vld [vmem:[#allocation8] sm:$0xff]
    %v173 = vld [vmem:[#allocation8 + $0x8] sm:$0xff]
    %v174 = vld [vmem:[#allocation8 + $0x10] sm:$0xff]
    %v175 = vld [vmem:[#allocation8 + $0x18] sm:$0xff]
    %v176 = vld [vmem:[#allocation8 + $0x20] sm:$0xff]
    %v177 = vld [vmem:[#allocation8 + $0x28] sm:$0xff]
    %v178 = vld [vmem:[#allocation8 + $0x30] sm:$0xff]
    %v179 = vld [vmem:[#allocation8 + $0x38] sm:$0xff]
    %v180 = vld [vmem:[#allocation8 + $0x40] sm:$0xff]
    %v181 = vld [vmem:[#allocation8 + $0x48] sm:$0xff]
    %v182 = vld [vmem:[#allocation8 + $0x50] sm:$0xff]
    %v183 = vld [vmem:[#allocation8 + $0x58] sm:$0xff]
    %v184 = vld [vmem:[#allocation8 + $0x60] sm:$0xff]
    %v185 = vld [vmem:[#allocation8 + $0x68] sm:$0xff]
    %v186 = vld [vmem:[#allocation8 + $0x70] sm:$0xff]
    %v187 = vld [vmem:[#allocation8 + $0x78] sm:$0xff]
    %v188 = vld [vmem:[%s5] sm:$0x1]
    %v190 = vlaneseq
    %v191 = vshrl.u32 %v190, 7
    %v192 = vsub.s32 0, %v191
    %v193 = vrot.slane %v188, %v192
    %195 = vmatprep.subr.mxu0 0.0
    %196 = vmatpush1.msra.mxu0 %v172
    %197 = vmatprep.subr.mxu0 0.0
    %198 = vmatpush1.msra.mxu0 %v173
    %199 = vmatprep.subr.mxu0 0.0
    %200 = vmatpush1.msra.mxu0 %v174
    %201 = vmatprep.subr.mxu0 0.0
    %202 = vmatpush1.msra.mxu0 %v175
    %203 = vmatprep.subr.mxu0 0.0
    %204 = vmatpush1.msra.mxu0 %v176
    %205 = vmatprep.subr.mxu0 0.0
    %206 = vmatpush1.msra.mxu0 %v177
    %207 = vmatprep.subr.mxu0 0.0
    %208 = vmatpush1.msra.mxu0 %v178
    %209 = vmatprep.subr.mxu0 0.0
    %210 = vmatpush1.msra.mxu0 %v179
    %211 = vmatprep.subr.mxu0 0.0
    %212 = vmatpush1.msra.mxu0 %v180
    %213 = vmatprep.subr.mxu0 0.0
    %214 = vmatpush1.msra.mxu0 %v181
    %215 = vmatprep.subr.mxu0 0.0
    %216 = vmatpush1.msra.mxu0 %v182
    %217 = vmatprep.subr.mxu0 0.0
    %218 = vmatpush1.msra.mxu0 %v183
    %219 = vmatprep.subr.mxu0 0.0
    %220 = vmatpush1.msra.mxu0 %v184
    %221 = vmatprep.subr.mxu0 0.0
    %222 = vmatpush1.msra.mxu0 %v185
    %223 = vmatprep.subr.mxu0 0.0
    %224 = vmatpush1.msra.mxu0 %v186
    %225 = vmatprep.subr.mxu0 0.0
    %226 = vmatpush1.msra.mxu0 %v187
    %227 = vmatprep.subr.mxu0 0.0
    %228 = vmatpush1.msra.mxu0 0.0
    %229 = vmatprep.subr.mxu0 0.0
    %230 = vmatpush1.msra.mxu0 0.0
    %231 = vmatprep.subr.mxu0 0.0
    %232 = vmatpush1.msra.mxu0 0.0
    %233 = vmatprep.subr.mxu0 0.0
    %234 = vmatpush1.msra.mxu0 0.0
    %235 = vmatprep.subr.mxu0 0.0
    %236 = vmatpush1.msra.mxu0 0.0
    %237 = vmatprep.subr.mxu0 0.0
    %238 = vmatpush1.msra.mxu0 0.0
    %239 = vmatprep.subr.mxu0 0.0
    %240 = vmatpush1.msra.mxu0 0.0
    %241 = vmatprep.subr.mxu0 0.0
    %242 = vmatpush1.msra.mxu0 0.0
    %243 = vmatprep.subr.mxu0 0.0
    %244 = vmatpush1.msra.mxu0 0.0
    %245 = vmatprep.subr.mxu0 0.0
    %246 = vmatpush1.msra.mxu0 0.0
    %247 = vmatprep.subr.mxu0 0.0
    %248 = vmatpush1.msra.mxu0 0.0
    %249 = vmatprep.subr.mxu0 0.0
    %250 = vmatpush1.msra.mxu0 0.0
    %251 = vmatprep.subr.mxu0 0.0
    %252 = vmatpush1.msra.mxu0 0.0
    %253 = vmatprep.subr.mxu0 0.0
    %254 = vmatpush1.msra.mxu0 0.0
    %255 = vmatprep.subr.mxu0 0.0
    %256 = vmatpush1.msra.mxu0 0.0
    %257 = vmatprep.subr.mxu0 0.0
    %258 = vmatpush1.msra.mxu0 0.0
    %259 = vmatprep.mubr.f32.mxu0 0.0
    %260 = vmatmul.mubr.f32.gmra.mrb[0].mxu0 %v171
    %v261 = vpop.f32.mrb[0].mxu0
    %v262 = vadd.f32 %v193, %v261
    %v263 = vpop.f32.mrb[0].mxu0
    %264 = vdwg.mxu0
    %265 = vst [vmem:[#allocation11] sm:$0xff] %v262
    // Predicated region
    $region42: #{tpu_custom_call.1} parent=1 // pred_check
      _
    $region43: #{tpu_custom_call.1} parent=1 // pred_check_branch
      %267 = sbr.rel (0) target = $region45
    $region44: #{tpu_custom_call.1} parent=1 // pred_region
      %s269 = ssub.s32 128, 128
      %270 = vsyncadd [#allocation4], %s269
      %s272 = sshll.u32 [#allocation10], 4
      %s273 = int_to_ptr.vmem [resolvable:$true] %s272
      %275 = dma.vmem_to_hbm [thread:$0]  %s273, 128, %s6, [#allocation4]
    $region45: #{tpu_custom_call.1} parent=1 // pred_fallthru
      _
    // Predicated region
    $region46: #{tpu_custom_call.1} parent=1 // pred_check
      _
    $region47: #{tpu_custom_call.1} parent=1 // pred_check_branch
      %277 = sbr.rel (0) target = $region49
    $region48: #{tpu_custom_call.1} parent=1 // pred_region
      %s279 = ssub.s32 128, 128
      %280 = vsyncadd [#allocation12], %s279
      %s282 = sshll.u32 [#allocation11], 4
      %s283 = int_to_ptr.vmem [resolvable:$true] %s282
      %285 = dma.vmem_to_hbm [thread:$0]  %s283, 128, %s7, [#allocation12]
    $region49: #{tpu_custom_call.1} parent=1 // pred_fallthru
      _
    // Predicated region
    $region50: #{tpu_custom_call.1} parent=1 // pred_check
      _
    $region51: #{tpu_custom_call.1} parent=1 // pred_check_branch
      %287 = sbr.rel (0) target = $region53
    $region52: #{tpu_custom_call.1} parent=1 // pred_region
      %288 = dma.done [#allocation4], 128
    $region53: #{tpu_custom_call.1} parent=1 // pred_fallthru
      _
    // Predicated region
    $region54: #{tpu_custom_call.1} parent=1 // pred_check
      _
    $region55: #{tpu_custom_call.1} parent=1 // pred_check_branch
      %290 = sbr.rel (0) target = $region57
    $region56: #{tpu_custom_call.1} parent=1 // pred_region
      %291 = dma.done [#allocation12], 128
    $region57: #{tpu_custom_call.1} parent=1 // pred_fallthru
      _
    %292 = vsyncpa [#allocation3], 1
    %293 = vsyncpa [#allocation6], 1
    %294 = vsyncpa [#allocation9], 1
    %295 = vsyncpa [#allocation4], 1
    %296 = vsyncpa [#allocation12], 1

</llo_original>
